<compile_context>
chip_gen: v6e
topology: v6e:2x2x1
jax: 0.10.0
libtpu: 0.0.40
codegen_flags: <defaults>
</compile_context>

<pallas_src>
import functools

import jax
import jax.numpy as jnp
from jax.experimental import pallas as pl
from jax.experimental.pallas import tpu as pltpu


def _scalenorm_kernel(scale_ref, x_ref, o_ref, *, eps):
    # scale_ref: SMEM (1,) f32 scalar parameter
    # x_ref/o_ref: VMEM (row_tile, H)
    x = x_ref[...].astype(jnp.float32)
    sq = jnp.sum(x * x, axis=-1, keepdims=True)          # (row_tile, 1)
    # norm >= 0, so clamp(norm, eps) == sqrt(max(sq, eps*eps)); rsqrt fuses
    # the reciprocal + sqrt onto the EUP.
    factor = scale_ref[0] * jax.lax.rsqrt(jnp.maximum(sq, eps * eps))
    o_ref[...] = (x * factor).astype(o_ref.dtype)


def _pick_row_tile(R, H, dtype_bytes):
    """Largest sensible row tile: big enough to amortize per-step overhead,
    small enough that double-buffered in/out + f32 temps fit v7x's 64 MiB VMEM
    with headroom."""
    # sublane packing granularity for the row axis
    if dtype_bytes >= 4:
        sub = 8
    elif dtype_bytes == 2:
        sub = 16
    else:
        sub = 32

    # Per row of the block:
    #   2x double-buffered input + 2x double-buffered output  -> 4*dtype_bytes*H
    #   f32 working copy + f32 output of the scaled product   -> ~8*H
    per_row = H * (4 * dtype_bytes + 8)
    budget = 24 * 1024 * 1024                 # conservative across v5e/v6e/v7x
    tile = budget // max(per_row, 1)
    tile = min(tile, 1024)                    # diminishing returns beyond this
    tile = max(sub, (tile // sub) * sub)

    # Never taller than needed to cover all rows (rounded up to packing).
    rows_padded = max(sub, ((R + sub - 1) // sub) * sub)
    tile = min(tile, rows_padded)
    tile = max(sub, (tile // sub) * sub)
    return tile


def scale_norm(x, scale, eps=1e-05, *, row_tile=None):
    """ScaleNorm forward.  x: (..., H); scale: scalar parameter."""
    orig_shape = x.shape
    H = orig_shape[-1]
    x2 = x.reshape(-1, H)
    R = x2.shape[0]
    dtype_bytes = jnp.dtype(x.dtype).itemsize

    if row_tile is None:
        row_tile = _pick_row_tile(R, H, dtype_bytes)

    grid = (pl.cdiv(R, row_tile),)

    # Explicit VMEM budget sized for the double-buffered blocks + f32 temps,
    # capped so it fits v7x's 64 MiB physical VMEM with headroom.
    block_bytes = row_tile * H * dtype_bytes
    vmem_needed = 4 * block_bytes + 2 * row_tile * H * 4 + (2 << 20)
    vmem_limit = int(min(max(vmem_needed, 16 * 1024 * 1024), 48 * 1024 * 1024))

    scale_arr = jnp.asarray(scale, dtype=jnp.float32).reshape(1)
    kernel = functools.partial(_scalenorm_kernel, eps=float(eps))

    # NOTE: for typical transformer H (multiple of 128) the output block is
    # lane-dense; very small H (like the H=32 test shape) lowers to masked
    # partial stores, which is correct but not representative of prod perf.
    out = pl.pallas_call(
        kernel,
        out_shape=jax.ShapeDtypeStruct((R, H), x.dtype),
        grid=grid,
        in_specs=[
            pl.BlockSpec(memory_space=pltpu.SMEM),              # scale param
            pl.BlockSpec((row_tile, H), lambda i: (i, 0)),      # x rows
        ],
        out_specs=pl.BlockSpec((row_tile, H), lambda i: (i, 0)),
        compiler_params=pltpu.CompilerParams(
            dimension_semantics=("parallel",),
            vmem_limit_bytes=vmem_limit,
        ),
        cost_estimate=pl.CostEstimate(
            flops=3 * R * H,
            transcendentals=R,
            bytes_accessed=2 * R * H * dtype_bytes,
        ),
    )(scale_arr, x2)

    return out.reshape(orig_shape)


def scale_norm_ref(x, scale, eps=1e-05):
    """Pure-JAX reference matching the PyTorch forward exactly."""
    norm = jnp.linalg.norm(x.astype(jnp.float32), axis=-1, keepdims=True)
    norm = jnp.maximum(norm, eps)
    return (x.astype(jnp.float32) * (scale / norm)).astype(x.dtype)


if __name__ == "__main__":
    key = jax.random.PRNGKey(0)
    batch, seq, hidden = 2, 8, 32
    x = jax.random.normal(key, (batch, seq, hidden), dtype=jnp.float32)

    # Deterministic parameter init: ScaleNorm(scale=sqrt(hidden)) is the
    # conventional choice; eps matches the module default.
    scale = float(hidden) ** 0.5
    eps = 1e-05

    out = scale_norm(x, scale, eps)
    out = jax.block_until_ready(out)

    ref = scale_norm_ref(x, scale, eps)
    assert out.shape == x.shape
    assert jnp.allclose(out, ref, atol=1e-5, rtol=1e-5), (
        float(jnp.max(jnp.abs(out - ref))))

    print("KERNEL_OK")
</pallas_src>

<mosaic_0001>
module attributes {stable_mosaic.version = 11 : i64} {
  func.func @_scalenorm_kernel(%arg0: i32, %arg1: memref<1xf32, #tpu.memory_space<smem>>, %arg2: memref<16x32xf32, #tpu.memory_space<vmem>>, %arg3: memref<16x32xf32, #tpu.memory_space<vmem>>) attributes {dimension_semantics = [#tpu.dimension_semantics<parallel>], iteration_bounds = array<i64: 1>, scalar_prefetch = 0 : i64, scratch_operands = 0 : i64, tpu.core_type = #tpu.core_type<tc>, window_params = [{transform_indices = @transform_0, window_bounds = array<i64: 1>}, {transform_indices = @transform_1, window_bounds = array<i64: 16, 32>}, {transform_indices = @transform_2, window_bounds = array<i64: 16, 32>}]} {
    %c0 = arith.constant 0 : index
    %c0_0 = arith.constant 0 : index
    %0 = vector.load %arg2[%c0, %c0_0] : memref<16x32xf32, #tpu.memory_space<vmem>>, vector<16x32xf32>
    %1 = arith.mulf %0, %0 : vector<16x32xf32>
    %cst = arith.constant dense<0.000000e+00> : vector<16xf32>
    %2 = vector.multi_reduction <add>, %1, %cst [1] : vector<16x32xf32> to vector<16xf32>
    %3 = vector.shape_cast %2 : vector<16xf32> to vector<16x1xf32>
    %c0_1 = arith.constant 0 : index
    %4 = memref.load %arg1[%c0_1] : memref<1xf32, #tpu.memory_space<smem>>
    %cst_2 = arith.constant 1.000000e-10 : f32
    %5 = vector.broadcast %cst_2 : f32 to vector<16x1xf32>
    %6 = arith.maximumf %3, %5 : vector<16x1xf32>
    %7 = math.rsqrt %6 : vector<16x1xf32>
    %8 = vector.broadcast %4 : f32 to vector<16x1xf32>
    %9 = arith.mulf %8, %7 : vector<16x1xf32>
    %10 = vector.broadcast %9 : vector<16x1xf32> to vector<16x32xf32>
    %11 = arith.mulf %0, %10 : vector<16x32xf32>
    %c0_3 = arith.constant 0 : index
    %c0_4 = arith.constant 0 : index
    %12 = vector.load %arg3[%c0_3, %c0_4] : memref<16x32xf32, #tpu.memory_space<vmem>>, vector<16x32xf32>
    tpu.vector_store %arg3[%c0_3, %c0_4], %11 {strides = array<i32>} : memref<16x32xf32, #tpu.memory_space<vmem>>, vector<16x32xf32>,
    return
  }
  func.func @transform_0(%arg0: i32) -> i32 {
    %c0_i32 = arith.constant 0 : i32
    %c0_i32_0 = arith.constant 0 : i32
    return %c0_i32 : i32
  }
  func.func @transform_1(%arg0: i32) -> (i32, i32) {
    %c0_i32 = arith.constant 0 : i32
    %c0_i32_0 = arith.constant 0 : i32
    return %arg0, %c0_i32 : i32, i32
  }
  func.func @transform_2(%arg0: i32) -> (i32, i32) {
    %c0_i32 = arith.constant 0 : i32
    %c0_i32_0 = arith.constant 0 : i32
    return %arg0, %c0_i32 : i32, i32
  }
}

</mosaic_0001>

<llo_original>
// kernel: tpu_custom_call.1
$region0: #{tpu_custom_call.1}
  #allocation0 [shape = 'u32[]', space=smem, size = 0x4, offset = 0x4, fixed_abs, tag = 'smem constant byte address 0x4 - core index']
  #allocation1 [shape = 'u32[144,128]{1,0:T(1,128)}', space=vmem, size = 0x12000, scoped, tag = 'internal scratch']
  #allocation2 [shape = 'f32[1]{0:T(128)S(6)}', space=smem, size = 0x200, scoped, tag = 'scoped memory for tpu_custom_call.1']
  %s0 = inlined_call_operand.<no memory space> [shape: f32[1], index: 0, kind: input, shape index: {}]
  %s1 = inlined_call_operand.hbm [shape: f32[16,32], index: 1, kind: input, shape index: {}]
  %s2 = inlined_call_operand.hbm [shape: f32[16,32], index: 2, kind: output, shape index: {}]
  %s3 = sld [smem:[#allocation0]]
  $region22: #{tpu_custom_call.1} parent=0
    _
  %s5 = ssub.s32 1, %s3
  %s6 = scalar_select 0, %s5, %s3
  %7 = sst [smem:[#allocation2]] %s0
  $region1: #{tpu_custom_call.1} parent=0
    #allocation3 [shape = 'u8[8192]{0}', space=vmem, size = 0x2000, scoped, tag = 'input window, operand 1, single buffered']
    #allocation4 [shape = 's32[1]{0}', space=sflag, size = 0x4, scoped, tag = 'scoped memory for tpu_custom_call.1']
    #allocation5 [shape = 's32[1]{0}', space=sflag, size = 0x4, scoped, tag = 'scoped memory for tpu_custom_call.1']
    #allocation6 [shape = 'u8[8192]{0}', space=vmem, size = 0x2000, scoped, tag = 'output window, operand 0, single buffered']
    %8 = vsyncpa [#allocation4], 0
    %9 = vsyncpa [#allocation5], 0
    // Predicated region
    $region2: #{tpu_custom_call.1} parent=1 // pred_check
      _
    $region3: #{tpu_custom_call.1} parent=1 // pred_check_branch
      %11 = sbr.rel (0) target = $region5
    $region4: #{tpu_custom_call.1} parent=1 // pred_region
      _
    $region5: #{tpu_custom_call.1} parent=1 // pred_fallthru
      _
    // Predicated region
    $region6: #{tpu_custom_call.1} parent=1 // pred_check
      _
    $region7: #{tpu_custom_call.1} parent=1 // pred_check_branch
      %13 = sbr.rel (0) target = $region9
    $region8: #{tpu_custom_call.1} parent=1 // pred_region
      %s15 = ssub.s32 256, 256
      %16 = vsyncadd [#allocation4], %s15
      %s17 = sshll.u32 [#allocation3], 4
      %s18 = int_to_ptr.vmem [resolvable:$true] %s17
      %23 = dma.hbm_to_vmem [thread:$0]  %s1, 256, %s18, [#allocation4], 128, 128, 8
    $region9: #{tpu_custom_call.1} parent=1 // pred_fallthru
      _
    // Predicated region
    $region10: #{tpu_custom_call.1} parent=1 // pred_check
      _
    $region11: #{tpu_custom_call.1} parent=1 // pred_check_branch
      %25 = sbr.rel (0) target = $region13
    $region12: #{tpu_custom_call.1} parent=1 // pred_region
      %26 = dma.done [#allocation4], 256
    $region13: #{tpu_custom_call.1} parent=1 // pred_fallthru
      _
    %v27 = vld [vmem:[#allocation3] sm:$0xff]
    %v28 = vld [vmem:[#allocation3 + $0x8] sm:$0xff]
    %v29 = vmul.f32 %v27, %v27
    %v30 = vmul.f32 %v28, %v28
    %vm31 = vcmask 261120
    %v32 = vsel %vm31, %v29, 0.0
    %33 = vadd.xlane.f32.xlu0 %v32
    %v34 = vpop.xlane.xlu0 %33
    %v35 = vsel %vm31, %v30, 0.0
    %36 = vadd.xlane.f32.xlu0 %v35
    %v37 = vpop.xlane.xlu0 %36
    %s38 = sld [smem:[#allocation2]]
    %v39 = vmax.f32 %v34, 1e-10
    %v40 = vmax.f32 %v37, 1e-10
    %v41 = vrsqrt.pop %v39
    %v42 = vrsqrt.pop %v40
    %v43 = vstv %s38
    %v44 = vmul.f32 %v43, %v41
    %v45 = vmul.f32 %v43, %v42
    %v46 = vmul.f32 %v27, %v44
    %v47 = vmul.f32 %v28, %v45
    %48 = vst.msk [vmem:[#allocation6] sm:$0xff] %vm31, %v46
    %49 = vst.msk [vmem:[#allocation6 + $0x8] sm:$0xff] %vm31, %v47
    // Predicated region
    $region14: #{tpu_custom_call.1} parent=1 // pred_check
      _
    $region15: #{tpu_custom_call.1} parent=1 // pred_check_branch
      %51 = sbr.rel (0) target = $region17
    $region16: #{tpu_custom_call.1} parent=1 // pred_region
      %s53 = ssub.s32 256, 256
      %54 = vsyncadd [#allocation5], %s53
      %s55 = sshll.u32 [#allocation6], 4
      %s56 = int_to_ptr.vmem [resolvable:$true] %s55
      %61 = dma.vmem_to_hbm [thread:$0]  %s56, 256, %s2, [#allocation5], 128, 128, 8
    $region17: #{tpu_custom_call.1} parent=1 // pred_fallthru
      _
    // Predicated region
    $region18: #{tpu_custom_call.1} parent=1 // pred_check
      _
    $region19: #{tpu_custom_call.1} parent=1 // pred_check_branch
      %63 = sbr.rel (0) target = $region21
    $region20: #{tpu_custom_call.1} parent=1 // pred_region
      %64 = dma.done [#allocation5], 256
    $region21: #{tpu_custom_call.1} parent=1 // pred_fallthru
      _
    %65 = vsyncpa [#allocation4], 1
    %66 = vsyncpa [#allocation5], 1

</llo_original>
